<compile_context>
chip_gen: v7x
topology: tpu7x:2x2x1
jax: 0.10.0
libtpu: 0.0.40
codegen_flags: <defaults>
</compile_context>

<pallas_src>
import functools

import jax
import jax.numpy as jnp
from jax.experimental import pallas as pl
from jax.experimental.pallas import tpu as pltpu

_BN_EPS = 1e-5
_LANE = 128


def _round_up(n, m):
    return ((n + m - 1) // m) * m


def _make_fused_mlp_kernel(num_hidden, use_bf16_matmul):
    """Kernel computing the whole MLP in one pass, fully VMEM-resident."""

    def _mm(lhs, rhs_ref):
        rhs = rhs_ref[...]  # pre-cast to bf16 in prepare_params if enabled
        if use_bf16_matmul:
            lhs = lhs.astype(jnp.bfloat16)
        return jnp.dot(lhs, rhs, preferred_element_type=jnp.float32)

    def kernel(*refs):
        x_ref = refs[0]
        o_ref = refs[-1]
        h = x_ref[...]
        inv_b = 1.0 / x_ref.shape[0]
        idx = 1
        for _ in range(num_hidden):
            w_ref, gamma_ref, beta_ref = refs[idx], refs[idx + 1], refs[idx + 2]
            idx += 3
            # Hidden Linear bias omitted: cancelled exactly by training-mode BN.
            z = _mm(h, w_ref)                                     # (B, Dp) f32
            # BN folded to per-feature scale/shift; var via E[z^2] - mean^2.
            mean = jnp.sum(z, axis=0, keepdims=True) * inv_b      # (1, Dp)
            mean_sq = jnp.sum(z * z, axis=0, keepdims=True) * inv_b
            var = mean_sq - mean * mean                           # biased (PyTorch BN fwd)
            scale = gamma_ref[...] * jax.lax.rsqrt(var + _BN_EPS)  # EUP rsqrt
            shift = beta_ref[...] - mean * scale
            h = jnp.maximum(z * scale + shift, 0.0)               # fused BN + ReLU
        w_ref, b_ref = refs[idx], refs[idx + 1]
        o_ref[...] = _mm(h, w_ref) + b_ref[...]

    return kernel


def prepare_params(params, in_features, use_bf16_matmul=False):
    """One-time packing: pad feature dims to multiples of 128 (lane-dense) and
    optionally cast weights to bf16. Padding is feature-axis only, so BN batch
    statistics are unchanged; padded gamma/beta stay 0 so padded lanes emit 0.
    """
    num_hidden = len(params) - 1
    dims = [in_features] + [p["w"].shape[1] for p in params]
    pdims = [_round_up(d, _LANE) for d in dims]
    w_dtype = jnp.bfloat16 if use_bf16_matmul else jnp.float32

    packed = []
    for i, p in enumerate(params):
        w = jnp.pad(
            p["w"],
            ((0, pdims[i] - p["w"].shape[0]), (0, pdims[i + 1] - p["w"].shape[1])),
        ).astype(w_dtype)
        if i < num_hidden:
            gamma = jnp.pad(p["gamma"], ((0, 0), (0, pdims[i + 1] - p["gamma"].shape[1])))
            beta = jnp.pad(p["beta"], ((0, 0), (0, pdims[i + 1] - p["beta"].shape[1])))
            packed += [w, gamma, beta]
        else:
            b = jnp.pad(p["b"], ((0, 0), (0, pdims[i + 1] - p["b"].shape[1])))
            packed += [w, b]

    return {
        "args": tuple(packed),
        "dims": tuple(dims),
        "pdims": tuple(pdims),
        "num_hidden": num_hidden,
        "use_bf16_matmul": use_bf16_matmul,
    }


@functools.partial(
    jax.jit, static_argnames=("dims", "pdims", "num_hidden", "use_bf16_matmul")
)
def mlp_forward(x, args, dims, pdims, num_hidden, use_bf16_matmul=False):
    """Single fused pallas_call over all layers using pre-padded params."""
    batch, din = x.shape
    # Only the activation input needs per-call padding (feature axis only).
    xp = x if din == pdims[0] else jnp.pad(x, ((0, 0), (0, pdims[0] - din)))
    all_args = (xp,) + tuple(args)

    flops = 2 * batch * sum(pdims[i] * pdims[i + 1] for i in range(len(pdims) - 1))
    bytes_accessed = (
        sum(int(a.size) * a.dtype.itemsize for a in all_args) + batch * pdims[-1] * 4
    )
    cost = pl.CostEstimate(
        flops=flops,
        transcendentals=sum(pdims[1 : num_hidden + 1]),  # one rsqrt per hidden feature
        bytes_accessed=bytes_accessed,
    )

    # VMEM budget: all inputs (x2 for double-buffer headroom) + two live
    # (B, max Dp) f32 activation buffers + 1 MiB slack. Clamp to [8, 64] MiB so
    # it is valid on every gen (v7x has 64 MiB physical VMEM per TC).
    act_bytes = 2 * batch * max(pdims) * 4
    vmem_bytes = 2 * bytes_accessed + act_bytes + (1 << 20)
    vmem_bytes = min(max(vmem_bytes, 8 << 20), 64 << 20)

    out_padded = pl.pallas_call(
        _make_fused_mlp_kernel(num_hidden, use_bf16_matmul),
        out_shape=jax.ShapeDtypeStruct((batch, pdims[-1]), jnp.float32),
        in_specs=[pl.BlockSpec(memory_space=pltpu.MemorySpace.VMEM)] * len(all_args),
        out_specs=pl.BlockSpec(memory_space=pltpu.MemorySpace.VMEM),
        cost_estimate=cost,
        compiler_params=pltpu.CompilerParams(vmem_limit_bytes=int(vmem_bytes)),
    )(*all_args)
    return out_padded[:, : dims[-1]]


def init_mlp_params(key, in_features, layer_sizes):
    """Deterministic init mirroring PyTorch Lazy{Linear,BatchNorm1d}.

    Linear: W, b ~ U(-1/sqrt(fan_in), 1/sqrt(fan_in)); BN: weight=1, bias=0.
    Weights stored transposed to (in, out) for y = x @ W + b. Hidden-layer
    biases are kept in the tree (faithful to PyTorch) but not consumed by the
    kernel because training-mode BN cancels them.
    """
    params = []
    fan_in = in_features
    for i, out_features in enumerate(layer_sizes):
        key, kw, kb = jax.random.split(key, 3)
        bound = 1.0 / (fan_in ** 0.5)
        w = jax.random.uniform(kw, (fan_in, out_features), jnp.float32, -bound, bound)
        b = jax.random.uniform(kb, (1, out_features), jnp.float32, -bound, bound)
        if i == len(layer_sizes) - 1:
            params.append({"w": w, "b": b})
        else:
            gamma = jnp.ones((1, out_features), jnp.float32)
            beta = jnp.zeros((1, out_features), jnp.float32)
            params.append({"w": w, "b": b, "gamma": gamma, "beta": beta})
        fan_in = out_features
    return params


def mlp_reference(x, params):
    """Pure-JAX reference matching the PyTorch forward (training-mode BN),
    including the (BN-cancelled) hidden-layer biases."""
    for p in params[:-1]:
        z = x @ p["w"] + p["b"]
        mean = jnp.mean(z, axis=0, keepdims=True)
        var = jnp.mean((z - mean) ** 2, axis=0, keepdims=True)
        z = (z - mean) / jnp.sqrt(var + _BN_EPS)
        x = jnp.maximum(z * p["gamma"] + p["beta"], 0.0)
    p = params[-1]
    return x @ p["w"] + p["b"]


if __name__ == "__main__":
    key = jax.random.PRNGKey(0)
    key, kx, kp = jax.random.split(key, 3)

    batch = 8
    in_features = 64
    layer_sizes = (32, 16, 10)  # two hidden [Linear-BN-ReLU] blocks + final Linear

    x = jax.random.normal(kx, (batch, in_features), jnp.float32)
    params = init_mlp_params(kp, in_features, layer_sizes)

    # One-time packing (padding + optional bf16 cast) — hoisted out of forward.
    prepped = prepare_params(params, in_features, use_bf16_matmul=False)

    out = mlp_forward(
        x,
        prepped["args"],
        prepped["dims"],
        prepped["pdims"],
        prepped["num_hidden"],
        use_bf16_matmul=prepped["use_bf16_matmul"],
    )
    out = jax.block_until_ready(out)

    ref = mlp_reference(x, params)
    assert out.shape == (batch, layer_sizes[-1])
    assert jnp.allclose(out, ref, atol=1e-4, rtol=1e-4)

    print("KERNEL_OK")
</pallas_src>

<mosaic_0001>
module attributes {stable_mosaic.version = 11 : i64} {
  func.func @kernel(%arg0: memref<8x128xf32, #tpu.memory_space<vmem>>, %arg1: memref<128x128xf32, #tpu.memory_space<vmem>>, %arg2: memref<1x128xf32, #tpu.memory_space<vmem>>, %arg3: memref<1x128xf32, #tpu.memory_space<vmem>>, %arg4: memref<128x128xf32, #tpu.memory_space<vmem>>, %arg5: memref<1x128xf32, #tpu.memory_space<vmem>>, %arg6: memref<1x128xf32, #tpu.memory_space<vmem>>, %arg7: memref<128x128xf32, #tpu.memory_space<vmem>>, %arg8: memref<1x128xf32, #tpu.memory_space<vmem>>, %arg9: memref<8x128xf32, #tpu.memory_space<vmem>>) attributes {dimension_semantics = [], scalar_prefetch = 0 : i64, scratch_operands = 0 : i64, tpu.core_type = #tpu.core_type<tc>} {
    %c0 = arith.constant 0 : index
    %c0_0 = arith.constant 0 : index
    %0 = vector.load %arg0[%c0, %c0_0] : memref<8x128xf32, #tpu.memory_space<vmem>>, vector<8x128xf32>
    %c0_1 = arith.constant 0 : index
    %c0_2 = arith.constant 0 : index
    %1 = vector.load %arg1[%c0_1, %c0_2] : memref<128x128xf32, #tpu.memory_space<vmem>>, vector<128x128xf32>
    %cst = arith.constant dense<0.000000e+00> : vector<8x128xf32>
    %2 = tpu.matmul %0, %1, %cst {dimension_numbers = #tpu.dot_dimension_numbers<[1], [0], [0], [1], [0, 0, 1, 1], [], []>} : vector<8x128xf32>, vector<128x128xf32>, vector<8x128xf32> -> vector<8x128xf32>
    %cst_3 = arith.constant dense<0.000000e+00> : vector<128xf32>
    %3 = vector.multi_reduction <add>, %2, %cst_3 [0] : vector<8x128xf32> to vector<128xf32>
    %4 = vector.shape_cast %3 : vector<128xf32> to vector<1x128xf32>
    %cst_4 = arith.constant 1.250000e-01 : f32
    %5 = vector.broadcast %cst_4 : f32 to vector<1x128xf32>
    %6 = arith.mulf %4, %5 : vector<1x128xf32>
    %7 = arith.mulf %2, %2 : vector<8x128xf32>
    %cst_5 = arith.constant dense<0.000000e+00> : vector<128xf32>
    %8 = vector.multi_reduction <add>, %7, %cst_5 [0] : vector<8x128xf32> to vector<128xf32>
    %9 = vector.shape_cast %8 : vector<128xf32> to vector<1x128xf32>
    %cst_6 = arith.constant 1.250000e-01 : f32
    %10 = vector.broadcast %cst_6 : f32 to vector<1x128xf32>
    %11 = arith.mulf %9, %10 : vector<1x128xf32>
    %12 = arith.mulf %6, %6 : vector<1x128xf32>
    %13 = arith.subf %11, %12 : vector<1x128xf32>
    %c0_7 = arith.constant 0 : index
    %c0_8 = arith.constant 0 : index
    %14 = vector.load %arg2[%c0_7, %c0_8] : memref<1x128xf32, #tpu.memory_space<vmem>>, vector<1x128xf32>
    %cst_9 = arith.constant 9.99999974E-6 : f32
    %15 = vector.broadcast %cst_9 : f32 to vector<1x128xf32>
    %16 = arith.addf %13, %15 : vector<1x128xf32>
    %17 = math.rsqrt %16 : vector<1x128xf32>
    %18 = arith.mulf %14, %17 : vector<1x128xf32>
    %c0_10 = arith.constant 0 : index
    %c0_11 = arith.constant 0 : index
    %19 = vector.load %arg3[%c0_10, %c0_11] : memref<1x128xf32, #tpu.memory_space<vmem>>, vector<1x128xf32>
    %20 = arith.mulf %6, %18 : vector<1x128xf32>
    %21 = arith.subf %19, %20 : vector<1x128xf32>
    %22 = vector.broadcast %18 : vector<1x128xf32> to vector<8x128xf32>
    %23 = arith.mulf %2, %22 : vector<8x128xf32>
    %24 = vector.broadcast %21 : vector<1x128xf32> to vector<8x128xf32>
    %25 = arith.addf %23, %24 : vector<8x128xf32>
    %cst_12 = arith.constant 0.000000e+00 : f32
    %26 = vector.broadcast %cst_12 : f32 to vector<8x128xf32>
    %27 = arith.maximumf %25, %26 : vector<8x128xf32>
    %c0_13 = arith.constant 0 : index
    %c0_14 = arith.constant 0 : index
    %28 = vector.load %arg4[%c0_13, %c0_14] : memref<128x128xf32, #tpu.memory_space<vmem>>, vector<128x128xf32>
    %cst_15 = arith.constant dense<0.000000e+00> : vector<8x128xf32>
    %29 = tpu.matmul %27, %28, %cst_15 {dimension_numbers = #tpu.dot_dimension_numbers<[1], [0], [0], [1], [0, 0, 1, 1], [], []>} : vector<8x128xf32>, vector<128x128xf32>, vector<8x128xf32> -> vector<8x128xf32>
    %cst_16 = arith.constant dense<0.000000e+00> : vector<128xf32>
    %30 = vector.multi_reduction <add>, %29, %cst_16 [0] : vector<8x128xf32> to vector<128xf32>
    %31 = vector.shape_cast %30 : vector<128xf32> to vector<1x128xf32>
    %cst_17 = arith.constant 1.250000e-01 : f32
    %32 = vector.broadcast %cst_17 : f32 to vector<1x128xf32>
    %33 = arith.mulf %31, %32 : vector<1x128xf32>
    %34 = arith.mulf %29, %29 : vector<8x128xf32>
    %cst_18 = arith.constant dense<0.000000e+00> : vector<128xf32>
    %35 = vector.multi_reduction <add>, %34, %cst_18 [0] : vector<8x128xf32> to vector<128xf32>
    %36 = vector.shape_cast %35 : vector<128xf32> to vector<1x128xf32>
    %cst_19 = arith.constant 1.250000e-01 : f32
    %37 = vector.broadcast %cst_19 : f32 to vector<1x128xf32>
    %38 = arith.mulf %36, %37 : vector<1x128xf32>
    %39 = arith.mulf %33, %33 : vector<1x128xf32>
    %40 = arith.subf %38, %39 : vector<1x128xf32>
    %c0_20 = arith.constant 0 : index
    %c0_21 = arith.constant 0 : index
    %41 = vector.load %arg5[%c0_20, %c0_21] : memref<1x128xf32, #tpu.memory_space<vmem>>, vector<1x128xf32>
    %cst_22 = arith.constant 9.99999974E-6 : f32
    %42 = vector.broadcast %cst_22 : f32 to vector<1x128xf32>
    %43 = arith.addf %40, %42 : vector<1x128xf32>
    %44 = math.rsqrt %43 : vector<1x128xf32>
    %45 = arith.mulf %41, %44 : vector<1x128xf32>
    %c0_23 = arith.constant 0 : index
    %c0_24 = arith.constant 0 : index
    %46 = vector.load %arg6[%c0_23, %c0_24] : memref<1x128xf32, #tpu.memory_space<vmem>>, vector<1x128xf32>
    %47 = arith.mulf %33, %45 : vector<1x128xf32>
    %48 = arith.subf %46, %47 : vector<1x128xf32>
    %49 = vector.broadcast %45 : vector<1x128xf32> to vector<8x128xf32>
    %50 = arith.mulf %29, %49 : vector<8x128xf32>
    %51 = vector.broadcast %48 : vector<1x128xf32> to vector<8x128xf32>
    %52 = arith.addf %50, %51 : vector<8x128xf32>
    %cst_25 = arith.constant 0.000000e+00 : f32
    %53 = vector.broadcast %cst_25 : f32 to vector<8x128xf32>
    %54 = arith.maximumf %52, %53 : vector<8x128xf32>
    %c0_26 = arith.constant 0 : index
    %c0_27 = arith.constant 0 : index
    %55 = vector.load %arg7[%c0_26, %c0_27] : memref<128x128xf32, #tpu.memory_space<vmem>>, vector<128x128xf32>
    %cst_28 = arith.constant dense<0.000000e+00> : vector<8x128xf32>
    %56 = tpu.matmul %54, %55, %cst_28 {dimension_numbers = #tpu.dot_dimension_numbers<[1], [0], [0], [1], [0, 0, 1, 1], [], []>} : vector<8x128xf32>, vector<128x128xf32>, vector<8x128xf32> -> vector<8x128xf32>
    %c0_29 = arith.constant 0 : index
    %c0_30 = arith.constant 0 : index
    %57 = vector.load %arg8[%c0_29, %c0_30] : memref<1x128xf32, #tpu.memory_space<vmem>>, vector<1x128xf32>
    %58 = vector.broadcast %57 : vector<1x128xf32> to vector<8x128xf32>
    %59 = arith.addf %56, %58 : vector<8x128xf32>
    %c0_31 = arith.constant 0 : index
    %c0_32 = arith.constant 0 : index
    %60 = vector.load %arg9[%c0_31, %c0_32] : memref<8x128xf32, #tpu.memory_space<vmem>>, vector<8x128xf32>
    tpu.vector_store %arg9[%c0_31, %c0_32], %59 {strides = array<i32>} : memref<8x128xf32, #tpu.memory_space<vmem>>, vector<8x128xf32>,
    return
  }
}

</mosaic_0001>

<llo_original>
// kernel: mlp_forward.1
$region0: #{mlp_forward.1}
  #allocation0 [shape = 'u32[]', space=smem, size = 0x4, offset = 0x4, fixed_abs, tag = 'smem constant byte address 0x4 - core index']
  #allocation1 [shape = 'u32[144,128]{1,0:T(1,128)}', space=vmem, size = 0x12000, scoped, tag = 'internal scratch']
  %s0 = inlined_call_operand.vmem [shape: f32[8,128], index: 0, kind: input, shape index: {}]
  %s1 = inlined_call_operand.hbm [shape: f32[128,128], index: 1, kind: input, shape index: {}]
  %s2 = inlined_call_operand.vmem [shape: f32[1,128], index: 2, kind: input, shape index: {}]
  %s3 = inlined_call_operand.vmem [shape: f32[1,128], index: 3, kind: input, shape index: {}]
  %s4 = inlined_call_operand.hbm [shape: f32[128,128], index: 4, kind: input, shape index: {}]
  %s5 = inlined_call_operand.vmem [shape: f32[1,128], index: 5, kind: input, shape index: {}]
  %s6 = inlined_call_operand.vmem [shape: f32[1,128], index: 6, kind: input, shape index: {}]
  %s7 = inlined_call_operand.hbm [shape: f32[128,128], index: 7, kind: input, shape index: {}]
  %s8 = inlined_call_operand.vmem [shape: f32[1,128], index: 8, kind: input, shape index: {}]
  %s9 = inlined_call_operand.hbm [shape: f32[8,128], index: 9, kind: output, shape index: {}]
  %s10 = sld [smem:[#allocation0]]
  $region58: #{mlp_forward.1} parent=0
    _
  %s12 = ssub.s32 1, %s10
  %s13 = scalar_select 0, %s12, %s10
  $region1: #{mlp_forward.1} parent=0
    #allocation2 [shape = 'u8[65536]{0}', space=vmem, size = 0x10000, scoped, tag = 'input window, operand 1, single buffered']
    #allocation3 [shape = 's32[1]{0}', space=sflag, size = 0x4, scoped, tag = 'scoped memory for mlp_forward.1']
    #allocation4 [shape = 's32[1]{0}', space=sflag, size = 0x4, scoped, tag = 'scoped memory for mlp_forward.1']
    #allocation5 [shape = 'u8[65536]{0}', space=vmem, size = 0x10000, scoped, tag = 'input window, operand 4, single buffered']
    #allocation6 [shape = 's32[1]{0}', space=sflag, size = 0x4, scoped, tag = 'scoped memory for mlp_forward.1']
    #allocation7 [shape = 'u8[65536]{0}', space=vmem, size = 0x10000, scoped, tag = 'input window, operand 7, single buffered']
    #allocation8 [shape = 'u8[4096]{0}', space=vmem, size = 0x1000, scoped, tag = 'output window, operand 0, single buffered']
    %14 = vsyncpa [#allocation3], 0
    %15 = vsyncpa [#allocation6], 0
    %16 = vsyncpa [#allocation4], 0
    // Predicated region
    $region2: #{mlp_forward.1} parent=1 // pred_check
      _
    $region3: #{mlp_forward.1} parent=1 // pred_check_branch
      %18 = sbr.rel (0) target = $region5
    $region4: #{mlp_forward.1} parent=1 // pred_region
      _
    $region5: #{mlp_forward.1} parent=1 // pred_fallthru
      _
    // Predicated region
    $region6: #{mlp_forward.1} parent=1 // pred_check
      _
    $region7: #{mlp_forward.1} parent=1 // pred_check_branch
      %20 = sbr.rel (0) target = $region9
    $region8: #{mlp_forward.1} parent=1 // pred_region
      %s22 = ssub.s32 2048, 2048
      %23 = vsyncadd [#allocation3], %s22
      %s24 = sshll.u32 [#allocation2], 4
      %s25 = int_to_ptr.vmem [resolvable:$true] %s24
      %30 = dma.hbm_to_vmem [thread:$0]  %s1, 2048, %s25, [#allocation3], 128, 128, 8
    $region9: #{mlp_forward.1} parent=1 // pred_fallthru
      _
    // Predicated region
    $region10: #{mlp_forward.1} parent=1 // pred_check
      _
    $region11: #{mlp_forward.1} parent=1 // pred_check_branch
      %32 = sbr.rel (0) target = $region13
    $region12: #{mlp_forward.1} parent=1 // pred_region
      _
    $region13: #{mlp_forward.1} parent=1 // pred_fallthru
      _
    // Predicated region
    $region14: #{mlp_forward.1} parent=1 // pred_check
      _
    $region15: #{mlp_forward.1} parent=1 // pred_check_branch
      %34 = sbr.rel (0) target = $region17
    $region16: #{mlp_forward.1} parent=1 // pred_region
      _
    $region17: #{mlp_forward.1} parent=1 // pred_fallthru
      _
    // Predicated region
    $region18: #{mlp_forward.1} parent=1 // pred_check
      _
    $region19: #{mlp_forward.1} parent=1 // pred_check_branch
      %36 = sbr.rel (0) target = $region21
    $region20: #{mlp_forward.1} parent=1 // pred_region
      %s38 = ssub.s32 2048, 2048
      %39 = vsyncadd [#allocation6], %s38
      %s40 = sshll.u32 [#allocation5], 4
      %s41 = int_to_ptr.vmem [resolvable:$true] %s40
      %46 = dma.hbm_to_vmem [thread:$0]  %s4, 2048, %s41, [#allocation6], 128, 128, 8
    $region21: #{mlp_forward.1} parent=1 // pred_fallthru
      _
    // Predicated region
    $region22: #{mlp_forward.1} parent=1 // pred_check
      _
    $region23: #{mlp_forward.1} parent=1 // pred_check_branch
      %48 = sbr.rel (0) target = $region25
    $region24: #{mlp_forward.1} parent=1 // pred_region
      _
    $region25: #{mlp_forward.1} parent=1 // pred_fallthru
      _
    // Predicated region
    $region26: #{mlp_forward.1} parent=1 // pred_check
      _
    $region27: #{mlp_forward.1} parent=1 // pred_check_branch
      %50 = sbr.rel (0) target = $region29
    $region28: #{mlp_forward.1} parent=1 // pred_region
      _
    $region29: #{mlp_forward.1} parent=1 // pred_fallthru
      _
    // Predicated region
    $region30: #{mlp_forward.1} parent=1 // pred_check
      _
    $region31: #{mlp_forward.1} parent=1 // pred_check_branch
      %52 = sbr.rel (0) target = $region33
    $region32: #{mlp_forward.1} parent=1 // pred_region
      %s54 = ssub.s32 2048, 2048
      %55 = vsyncadd [#allocation6], %s54
      %s56 = sshll.u32 [#allocation7], 4
      %s57 = int_to_ptr.vmem [resolvable:$true] %s56
      %62 = dma.hbm_to_vmem [thread:$0]  %s7, 2048, %s57, [#allocation6], 128, 128, 8
    $region33: #{mlp_forward.1} parent=1 // pred_fallthru
      _
    // Predicated region
    $region34: #{mlp_forward.1} parent=1 // pred_check
      _
    $region35: #{mlp_forward.1} parent=1 // pred_check_branch
      %64 = sbr.rel (0) target = $region37
    $region36: #{mlp_forward.1} parent=1 // pred_region
      _
    $region37: #{mlp_forward.1} parent=1 // pred_fallthru
      _
    // Predicated region
    $region38: #{mlp_forward.1} parent=1 // pred_check
      _
    $region39: #{mlp_forward.1} parent=1 // pred_check_branch
      %66 = sbr.rel (0) target = $region41
    $region40: #{mlp_forward.1} parent=1 // pred_region
      %67 = dma.done [#allocation3], 2048
    $region41: #{mlp_forward.1} parent=1 // pred_fallthru
      _
    // Predicated region
    $region42: #{mlp_forward.1} parent=1 // pred_check
      _
    $region43: #{mlp_forward.1} parent=1 // pred_check_branch
      %69 = sbr.rel (0) target = $region45
    $region44: #{mlp_forward.1} parent=1 // pred_region
      %70 = dma.done [#allocation6], 2048
    $region45: #{mlp_forward.1} parent=1 // pred_fallthru
      _
    // Predicated region
    $region46: #{mlp_forward.1} parent=1 // pred_check
      _
    $region47: #{mlp_forward.1} parent=1 // pred_check_branch
      %72 = sbr.rel (0) target = $region49
    $region48: #{mlp_forward.1} parent=1 // pred_region
      %73 = dma.done [#allocation6], 2048
    $region49: #{mlp_forward.1} parent=1 // pred_fallthru
      _
    %v74 = vld [vmem:[%s0] sm:$0xff]
    %v75 = vld [vmem:[#allocation2] sm:$0xff]
    %v76 = vld [vmem:[#allocation2 + $0x8] sm:$0xff]
    %v77 = vld [vmem:[#allocation2 + $0x10] sm:$0xff]
    %v78 = vld [vmem:[#allocation2 + $0x18] sm:$0xff]
    %v79 = vld [vmem:[#allocation2 + $0x20] sm:$0xff]
    %v80 = vld [vmem:[#allocation2 + $0x28] sm:$0xff]
    %v81 = vld [vmem:[#allocation2 + $0x30] sm:$0xff]
    %v82 = vld [vmem:[#allocation2 + $0x38] sm:$0xff]
    %v83 = vld [vmem:[#allocation2 + $0x40] sm:$0xff]
    %v84 = vld [vmem:[#allocation2 + $0x48] sm:$0xff]
    %v85 = vld [vmem:[#allocation2 + $0x50] sm:$0xff]
    %v86 = vld [vmem:[#allocation2 + $0x58] sm:$0xff]
    %v87 = vld [vmem:[#allocation2 + $0x60] sm:$0xff]
    %v88 = vld [vmem:[#allocation2 + $0x68] sm:$0xff]
    %v89 = vld [vmem:[#allocation2 + $0x70] sm:$0xff]
    %v90 = vld [vmem:[#allocation2 + $0x78] sm:$0xff]
    %91 = vmatprep.subr.mxu0 0.0
    %92 = vmatpush1.msra.mxu0 %v75
    %93 = vmatprep.subr.mxu0 0.0
    %94 = vmatpush1.msra.mxu0 %v76
    %95 = vmatprep.subr.mxu0 0.0
    %96 = vmatpush1.msra.mxu0 %v77
    %97 = vmatprep.subr.mxu0 0.0
    %98 = vmatpush1.msra.mxu0 %v78
    %99 = vmatprep.subr.mxu0 0.0
    %100 = vmatpush1.msra.mxu0 %v79
    %101 = vmatprep.subr.mxu0 0.0
    %102 = vmatpush1.msra.mxu0 %v80
    %103 = vmatprep.subr.mxu0 0.0
    %104 = vmatpush1.msra.mxu0 %v81
    %105 = vmatprep.subr.mxu0 0.0
    %106 = vmatpush1.msra.mxu0 %v82
    %107 = vmatprep.subr.mxu0 0.0
    %108 = vmatpush1.msra.mxu0 %v83
    %109 = vmatprep.subr.mxu0 0.0
    %110 = vmatpush1.msra.mxu0 %v84
    %111 = vmatprep.subr.mxu0 0.0
    %112 = vmatpush1.msra.mxu0 %v85
    %113 = vmatprep.subr.mxu0 0.0
    %114 = vmatpush1.msra.mxu0 %v86
    %115 = vmatprep.subr.mxu0 0.0
    %116 = vmatpush1.msra.mxu0 %v87
    %117 = vmatprep.subr.mxu0 0.0
    %118 = vmatpush1.msra.mxu0 %v88
    %119 = vmatprep.subr.mxu0 0.0
    %120 = vmatpush1.msra.mxu0 %v89
    %121 = vmatprep.subr.mxu0 0.0
    %122 = vmatpush1.msra.mxu0 %v90
    %123 = vmatprep.subr.mxu0 0.0
    %124 = vmatpush1.msra.mxu0 0.0
    %125 = vmatprep.subr.mxu0 0.0
    %126 = vmatpush1.msra.mxu0 0.0
    %127 = vmatprep.subr.mxu0 0.0
    %128 = vmatpush1.msra.mxu0 0.0
    %129 = vmatprep.subr.mxu0 0.0
    %130 = vmatpush1.msra.mxu0 0.0
    %131 = vmatprep.subr.mxu0 0.0
    %132 = vmatpush1.msra.mxu0 0.0
    %133 = vmatprep.subr.mxu0 0.0
    %134 = vmatpush1.msra.mxu0 0.0
    %135 = vmatprep.subr.mxu0 0.0
    %136 = vmatpush1.msra.mxu0 0.0
    %137 = vmatprep.subr.mxu0 0.0
    %138 = vmatpush1.msra.mxu0 0.0
    %139 = vmatprep.subr.mxu0 0.0
    %140 = vmatpush1.msra.mxu0 0.0
    %141 = vmatprep.subr.mxu0 0.0
    %142 = vmatpush1.msra.mxu0 0.0
    %143 = vmatprep.subr.mxu0 0.0
    %144 = vmatpush1.msra.mxu0 0.0
    %145 = vmatprep.subr.mxu0 0.0
    %146 = vmatpush1.msra.mxu0 0.0
    %147 = vmatprep.subr.mxu0 0.0
    %148 = vmatpush1.msra.mxu0 0.0
    %149 = vmatprep.subr.mxu0 0.0
    %150 = vmatpush1.msra.mxu0 0.0
    %151 = vmatprep.subr.mxu0 0.0
    %152 = vmatpush1.msra.mxu0 0.0
    %153 = vmatprep.subr.mxu0 0.0
    %154 = vmatpush1.msra.mxu0 0.0
    %155 = vmatprep.mubr.f32.mxu0 0.0
    %156 = vmatmul.mubr.f32.gmra.mrb[0].mxu0 %v74
    %v157 = vpop.f32.mrb[0].mxu0
    %v158 = vadd.f32 0.0, %v157
    %v159 = vpop.f32.mrb[0].mxu0
    %160 = vdwg.mxu0
    %v161 = vrot.slane %v158, 4
    %v162 = vadd.f32 %v158, %v161
    %v163 = vrot.slane %v162, 2
    %v164 = vadd.f32 %v162, %v163
    %v165 = vrot.slane %v164, 1
    %v166 = vadd.f32 %v164, %v165
    %v167 = vmul.f32 %v166, 0.125
    %v168 = vmul.f32 %v158, %v158
    %v169 = vrot.slane %v168, 4
    %v170 = vadd.f32 %v168, %v169
    %v171 = vrot.slane %v170, 2
    %v172 = vadd.f32 %v170, %v171
    %v173 = vrot.slane %v172, 1
    %v174 = vadd.f32 %v172, %v173
    %v175 = vmul.f32 %v174, 0.125
    %v176 = vmul.f32 %v167, %v167
    %v177 = vsub.f32 %v175, %v176
    %v178 = vld [vmem:[%s2] sm:$0x1]
    %v179 = vadd.f32 %v177, 1e-05
    %v180 = vrsqrt.pop %v179
    %v181 = vmul.f32 %v178, %v180
    %v182 = vld [vmem:[%s3] sm:$0x1]
    %v183 = vmul.f32 %v167, %v181
    %v184 = vsub.f32 %v182, %v183
    %v186 = vlaneseq
    %v187 = vshrl.u32 %v186, 7
    %v188 = vsub.s32 0, %v187
    %v189 = vrot.slane %v181, %v188
    %v191 = vmul.f32 %v158, %v189
    %v193 = vlaneseq
    %v194 = vshrl.u32 %v193, 7
    %v195 = vsub.s32 0, %v194
    %v196 = vrot.slane %v184, %v195
    %v198 = vadd.f32 %v191, %v196
    %v199 = vmax.f32 %v198, 0.0
    %v200 = vld [vmem:[#allocation5] sm:$0xff]
    %v201 = vld [vmem:[#allocation5 + $0x8] sm:$0xff]
    %v202 = vld [vmem:[#allocation5 + $0x10] sm:$0xff]
    %v203 = vld [vmem:[#allocation5 + $0x18] sm:$0xff]
    %v204 = vld [vmem:[#allocation5 + $0x20] sm:$0xff]
    %v205 = vld [vmem:[#allocation5 + $0x28] sm:$0xff]
    %v206 = vld [vmem:[#allocation5 + $0x30] sm:$0xff]
    %v207 = vld [vmem:[#allocation5 + $0x38] sm:$0xff]
    %v208 = vld [vmem:[#allocation5 + $0x40] sm:$0xff]
    %v209 = vld [vmem:[#allocation5 + $0x48] sm:$0xff]
    %v210 = vld [vmem:[#allocation5 + $0x50] sm:$0xff]
    %v211 = vld [vmem:[#allocation5 + $0x58] sm:$0xff]
    %v212 = vld [vmem:[#allocation5 + $0x60] sm:$0xff]
    %v213 = vld [vmem:[#allocation5 + $0x68] sm:$0xff]
    %v214 = vld [vmem:[#allocation5 + $0x70] sm:$0xff]
    %v215 = vld [vmem:[#allocation5 + $0x78] sm:$0xff]
    %216 = vmatprep.subr.mxu0 0.0
    %217 = vmatpush1.msra.mxu0 %v200
    %218 = vmatprep.subr.mxu0 0.0
    %219 = vmatpush1.msra.mxu0 %v201
    %220 = vmatprep.subr.mxu0 0.0
    %221 = vmatpush1.msra.mxu0 %v202
    %222 = vmatprep.subr.mxu0 0.0
    %223 = vmatpush1.msra.mxu0 %v203
    %224 = vmatprep.subr.mxu0 0.0
    %225 = vmatpush1.msra.mxu0 %v204
    %226 = vmatprep.subr.mxu0 0.0
    %227 = vmatpush1.msra.mxu0 %v205
    %228 = vmatprep.subr.mxu0 0.0
    %229 = vmatpush1.msra.mxu0 %v206
    %230 = vmatprep.subr.mxu0 0.0
    %231 = vmatpush1.msra.mxu0 %v207
    %232 = vmatprep.subr.mxu0 0.0
    %233 = vmatpush1.msra.mxu0 %v208
    %234 = vmatprep.subr.mxu0 0.0
    %235 = vmatpush1.msra.mxu0 %v209
    %236 = vmatprep.subr.mxu0 0.0
    %237 = vmatpush1.msra.mxu0 %v210
    %238 = vmatprep.subr.mxu0 0.0
    %239 = vmatpush1.msra.mxu0 %v211
    %240 = vmatprep.subr.mxu0 0.0
    %241 = vmatpush1.msra.mxu0 %v212
    %242 = vmatprep.subr.mxu0 0.0
    %243 = vmatpush1.msra.mxu0 %v213
    %244 = vmatprep.subr.mxu0 0.0
    %245 = vmatpush1.msra.mxu0 %v214
    %246 = vmatprep.subr.mxu0 0.0
    %247 = vmatpush1.msra.mxu0 %v215
    %248 = vmatprep.subr.mxu0 0.0
    %249 = vmatpush1.msra.mxu0 0.0
    %250 = vmatprep.subr.mxu0 0.0
    %251 = vmatpush1.msra.mxu0 0.0
    %252 = vmatprep.subr.mxu0 0.0
    %253 = vmatpush1.msra.mxu0 0.0
    %254 = vmatprep.subr.mxu0 0.0
    %255 = vmatpush1.msra.mxu0 0.0
    %256 = vmatprep.subr.mxu0 0.0
    %257 = vmatpush1.msra.mxu0 0.0
    %258 = vmatprep.subr.mxu0 0.0
    %259 = vmatpush1.msra.mxu0 0.0
    %260 = vmatprep.subr.mxu0 0.0
    %261 = vmatpush1.msra.mxu0 0.0
    %262 = vmatprep.subr.mxu0 0.0
    %263 = vmatpush1.msra.mxu0 0.0
    %264 = vmatprep.subr.mxu0 0.0
    %265 = vmatpush1.msra.mxu0 0.0
    %266 = vmatprep.subr.mxu0 0.0
    %267 = vmatpush1.msra.mxu0 0.0
    %268 = vmatprep.subr.mxu0 0.0
    %269 = vmatpush1.msra.mxu0 0.0
    %270 = vmatprep.subr.mxu0 0.0
    %271 = vmatpush1.msra.mxu0 0.0
    %272 = vmatprep.subr.mxu0 0.0
    %273 = vmatpush1.msra.mxu0 0.0
    %274 = vmatprep.subr.mxu0 0.0
    %275 = vmatpush1.msra.mxu0 0.0
    %276 = vmatprep.subr.mxu0 0.0
    %277 = vmatpush1.msra.mxu0 0.0
    %278 = vmatprep.subr.mxu0 0.0
    %279 = vmatpush1.msra.mxu0 0.0
    %280 = vmatprep.mubr.f32.mxu0 0.0
    %281 = vmatmul.mubr.f32.gmra.mrb[0].mxu0 %v199
    %v282 = vpop.f32.mrb[0].mxu0
    %v283 = vadd.f32 0.0, %v282
    %v284 = vpop.f32.mrb[0].mxu0
    %285 = vdwg.mxu0
    %v286 = vrot.slane %v283, 4
    %v287 = vadd.f32 %v283, %v286
    %v288 = vrot.slane %v287, 2
    %v289 = vadd.f32 %v287, %v288
    %v290 = vrot.slane %v289, 1
    %v291 = vadd.f32 %v289, %v290
    %v292 = vmul.f32 %v291, 0.125
    %v293 = vmul.f32 %v283, %v283
    %v294 = vrot.slane %v293, 4
    %v295 = vadd.f32 %v293, %v294
    %v296 = vrot.slane %v295, 2
    %v297 = vadd.f32 %v295, %v296
    %v298 = vrot.slane %v297, 1
    %v299 = vadd.f32 %v297, %v298
    %v300 = vmul.f32 %v299, 0.125
    %v301 = vmul.f32 %v292, %v292
    %v302 = vsub.f32 %v300, %v301
    %v303 = vld [vmem:[%s5] sm:$0x1]
    %v304 = vadd.f32 %v302, 1e-05
    %v305 = vrsqrt.pop %v304
    %v306 = vmul.f32 %v303, %v305
    %v307 = vld [vmem:[%s6] sm:$0x1]
    %v308 = vmul.f32 %v292, %v306
    %v309 = vsub.f32 %v307, %v308
    %v311 = vlaneseq
    %v312 = vshrl.u32 %v311, 7
    %v313 = vsub.s32 0, %v312
    %v314 = vrot.slane %v306, %v313
    %v316 = vmul.f32 %v283, %v314
    %v318 = vlaneseq
    %v319 = vshrl.u32 %v318, 7
    %v320 = vsub.s32 0, %v319
    %v321 = vrot.slane %v309, %v320
    %v323 = vadd.f32 %v316, %v321
    %v324 = vmax.f32 %v323, 0.0
    %v325 = vld [vmem:[#allocation7] sm:$0xff]
    %v326 = vld [vmem:[#allocation7 + $0x8] sm:$0xff]
    %v327 = vld [vmem:[#allocation7 + $0x10] sm:$0xff]
    %v328 = vld [vmem:[#allocation7 + $0x18] sm:$0xff]
    %v329 = vld [vmem:[#allocation7 + $0x20] sm:$0xff]
    %v330 = vld [vmem:[#allocation7 + $0x28] sm:$0xff]
    %v331 = vld [vmem:[#allocation7 + $0x30] sm:$0xff]
    %v332 = vld [vmem:[#allocation7 + $0x38] sm:$0xff]
    %v333 = vld [vmem:[#allocation7 + $0x40] sm:$0xff]
    %v334 = vld [vmem:[#allocation7 + $0x48] sm:$0xff]
    %v335 = vld [vmem:[#allocation7 + $0x50] sm:$0xff]
    %v336 = vld [vmem:[#allocation7 + $0x58] sm:$0xff]
    %v337 = vld [vmem:[#allocation7 + $0x60] sm:$0xff]
    %v338 = vld [vmem:[#allocation7 + $0x68] sm:$0xff]
    %v339 = vld [vmem:[#allocation7 + $0x70] sm:$0xff]
    %v340 = vld [vmem:[#allocation7 + $0x78] sm:$0xff]
    %v341 = vld [vmem:[%s8] sm:$0x1]
    %v343 = vlaneseq
    %v344 = vshrl.u32 %v343, 7
    %v345 = vsub.s32 0, %v344
    %v346 = vrot.slane %v341, %v345
    %348 = vmatprep.subr.mxu0 0.0
    %349 = vmatpush1.msra.mxu0 %v325
    %350 = vmatprep.subr.mxu0 0.0
    %351 = vmatpush1.msra.mxu0 %v326
    %352 = vmatprep.subr.mxu0 0.0
    %353 = vmatpush1.msra.mxu0 %v327
    %354 = vmatprep.subr.mxu0 0.0
    %355 = vmatpush1.msra.mxu0 %v328
    %356 = vmatprep.subr.mxu0 0.0
    %357 = vmatpush1.msra.mxu0 %v329
    %358 = vmatprep.subr.mxu0 0.0
    %359 = vmatpush1.msra.mxu0 %v330
    %360 = vmatprep.subr.mxu0 0.0
    %361 = vmatpush1.msra.mxu0 %v331
    %362 = vmatprep.subr.mxu0 0.0
    %363 = vmatpush1.msra.mxu0 %v332
    %364 = vmatprep.subr.mxu0 0.0
    %365 = vmatpush1.msra.mxu0 %v333
    %366 = vmatprep.subr.mxu0 0.0
    %367 = vmatpush1.msra.mxu0 %v334
    %368 = vmatprep.subr.mxu0 0.0
    %369 = vmatpush1.msra.mxu0 %v335
    %370 = vmatprep.subr.mxu0 0.0
    %371 = vmatpush1.msra.mxu0 %v336
    %372 = vmatprep.subr.mxu0 0.0
    %373 = vmatpush1.msra.mxu0 %v337
    %374 = vmatprep.subr.mxu0 0.0
    %375 = vmatpush1.msra.mxu0 %v338
    %376 = vmatprep.subr.mxu0 0.0
    %377 = vmatpush1.msra.mxu0 %v339
    %378 = vmatprep.subr.mxu0 0.0
    %379 = vmatpush1.msra.mxu0 %v340
    %380 = vmatprep.subr.mxu0 0.0
    %381 = vmatpush1.msra.mxu0 0.0
    %382 = vmatprep.subr.mxu0 0.0
    %383 = vmatpush1.msra.mxu0 0.0
    %384 = vmatprep.subr.mxu0 0.0
    %385 = vmatpush1.msra.mxu0 0.0
    %386 = vmatprep.subr.mxu0 0.0
    %387 = vmatpush1.msra.mxu0 0.0
    %388 = vmatprep.subr.mxu0 0.0
    %389 = vmatpush1.msra.mxu0 0.0
    %390 = vmatprep.subr.mxu0 0.0
    %391 = vmatpush1.msra.mxu0 0.0
    %392 = vmatprep.subr.mxu0 0.0
    %393 = vmatpush1.msra.mxu0 0.0
    %394 = vmatprep.subr.mxu0 0.0
    %395 = vmatpush1.msra.mxu0 0.0
    %396 = vmatprep.subr.mxu0 0.0
    %397 = vmatpush1.msra.mxu0 0.0
    %398 = vmatprep.subr.mxu0 0.0
    %399 = vmatpush1.msra.mxu0 0.0
    %400 = vmatprep.subr.mxu0 0.0
    %401 = vmatpush1.msra.mxu0 0.0
    %402 = vmatprep.subr.mxu0 0.0
    %403 = vmatpush1.msra.mxu0 0.0
    %404 = vmatprep.subr.mxu0 0.0
    %405 = vmatpush1.msra.mxu0 0.0
    %406 = vmatprep.subr.mxu0 0.0
    %407 = vmatpush1.msra.mxu0 0.0
    %408 = vmatprep.subr.mxu0 0.0
    %409 = vmatpush1.msra.mxu0 0.0
    %410 = vmatprep.subr.mxu0 0.0
    %411 = vmatpush1.msra.mxu0 0.0
    %412 = vmatprep.mubr.f32.mxu0 0.0
    %413 = vmatmul.mubr.f32.gmra.mrb[0].mxu0 %v324
    %v414 = vpop.f32.mrb[0].mxu0
    %v415 = vadd.f32 %v346, %v414
    %v416 = vpop.f32.mrb[0].mxu0
    %417 = vdwg.mxu0
    %418 = vst [vmem:[#allocation8] sm:$0xff] %v415
    // Predicated region
    $region50: #{mlp_forward.1} parent=1 // pred_check
      _
    $region51: #{mlp_forward.1} parent=1 // pred_check_branch
      %420 = sbr.rel (0) target = $region53
    $region52: #{mlp_forward.1} parent=1 // pred_region
      %s422 = ssub.s32 128, 128
      %423 = vsyncadd [#allocation4], %s422
      %s425 = sshll.u32 [#allocation8], 4
      %s426 = int_to_ptr.vmem [resolvable:$true] %s425
      %428 = dma.vmem_to_hbm [thread:$0]  %s426, 128, %s9, [#allocation4]
    $region53: #{mlp_forward.1} parent=1 // pred_fallthru
      _
    // Predicated region
    $region54: #{mlp_forward.1} parent=1 // pred_check
      _
    $region55: #{mlp_forward.1} parent=1 // pred_check_branch
      %430 = sbr.rel (0) target = $region57
    $region56: #{mlp_forward.1} parent=1 // pred_region
      %431 = dma.done [#allocation4], 128
    $region57: #{mlp_forward.1} parent=1 // pred_fallthru
      _
    %432 = vsyncpa [#allocation3], 1
    %433 = vsyncpa [#allocation6], 1
    %434 = vsyncpa [#allocation4], 1

</llo_original>
